<compile_context>
chip_gen: v5e
topology: v5e:2x2
jax: 0.10.0
libtpu: 0.0.40
codegen_flags: <defaults>
</compile_context>

<pallas_src>
import functools

import jax
import jax.numpy as jnp
from jax import lax
from jax.experimental import pallas as pl
from jax.experimental.pallas import tpu as pltpu


def _round_up(x, m):
    return ((x + m - 1) // m) * m


def _vmem_budget():
    """Generation-aware scoped-VMEM limit and tile-size target."""
    try:
        cap = int(getattr(pltpu.get_tpu_info(), "vmem_capacity_bytes", 0))
    except Exception:
        cap = 0
    if cap >= 100 * 1024 * 1024:          # v5e / v6e: 128 MiB physical VMEM
        return 80 * 1024 * 1024, 2048
    return 44 * 1024 * 1024, 1024         # v7x (64 MiB per TC) or unknown


def _pick_tile(dim, target):
    """Largest 128-multiple tile <= target; keep >=2 tiles when the padded dim
    allows it so the 'parallel' axis can shard across v7x's two TensorCores."""
    dim128 = _round_up(max(dim, 1), 128)
    t = min(target, dim128)
    if dim128 >= 256:
        t = min(t, max(128, (dim128 // 2) // 128 * 128))
    return max(128, (t // 128) * 128)


def _shrink_to_fit(te, tn, d_pad, c_in, limit):
    """Halve tiles until the heaviest phase's double-buffered blocks fit VMEM."""
    def usage(te, tn):
        # phase 1 (fused): H(te,tn) bf16, X(tn,c_in) bf16, W(c_in,d_pad) bf16,
        # se(te,1) f32, out(te,d_pad) bf16  -> all x2 buffers; + f32 acc + xw tmp
        p1 = 2 * (te * tn * 2 + tn * c_in * 2 + c_in * d_pad * 2
                  + te * 4 + te * d_pad * 2) + te * d_pad * 4 + tn * d_pad * 4
        # phase 2: Ht(tn,te) bf16, xe(te,d_pad) bf16, dv(tn,1) f32,
        # out(tn,d_pad) f32 -> x2 buffers; + f32 acc
        p2 = 2 * (tn * te * 2 + te * d_pad * 2 + tn * 4
                  + tn * d_pad * 4) + tn * d_pad * 4
        return max(p1, p2)
    while usage(te, tn) > int(0.75 * limit) and max(te, tn) > 128:
        if te >= tn:
            te = max(128, (te // 2) // 128 * 128)
        else:
            tn = max(128, (tn // 2) // 128 * 128)
    return te, tn


def prepare_unigcn_graph(H, inv_cnt, degE, degV, d_out, c_in, *,
                         tile_target=None, vmem_limit=None):
    """Pad + cast the per-graph operands ONCE (hoisted out of the per-call path).

    Returns a dict reusable across layers / training steps.
    Note: bf16 stores integer incidence multiplicities exactly only up to 256.
    """
    E, N = H.shape
    d_pad = _round_up(d_out, 128)
    default_limit, default_target = _vmem_budget()
    limit = vmem_limit or default_limit
    target = tile_target or default_target
    te = _pick_tile(E, target)
    tn = _pick_tile(N, target)
    te, tn = _shrink_to_fit(te, tn, d_pad, c_in, limit)
    e_pad = _round_up(E, te)
    n_pad = _round_up(N, tn)

    if not isinstance(H, jax.core.Tracer):
        assert float(jnp.max(H)) <= 256.0, "H multiplicities too large for bf16"

    bf16 = jnp.bfloat16
    f32 = jnp.float32
    Hp = jnp.zeros((e_pad, n_pad), bf16).at[:E, :N].set(H.astype(bf16))
    # H^T materialized once so phase 2 avoids a per-tile XLU transpose.
    Htp = jnp.zeros((n_pad, e_pad), bf16).at[:N, :E].set(H.T.astype(bf16))
    # Fuse the two per-edge scalars into one vector (one DMA, one VPU pass).
    SEp = jnp.zeros((e_pad, 1), f32).at[:E].set(
        (inv_cnt * degE).astype(f32).reshape(E, 1))
    DVp = jnp.zeros((n_pad, 1), f32).at[:N].set(
        degV.astype(f32).reshape(N, 1))
    return dict(Hp=Hp, Htp=Htp, SEp=SEp, DVp=DVp, N=N, E=E,
                N_pad=n_pad, E_pad=e_pad, TN=tn, TE=te,
                D_pad=d_pad, vmem_limit=limit)


# ---------- phase 0 (only when C_in is large): XW = X @ W_t ----------
def _proj_kernel(x_ref, w_ref, o_ref):
    # bf16 x bf16 -> f32 on the MXU, stored bf16 (re-read E_pad/TE times).
    o_ref[...] = jnp.dot(x_ref[...], w_ref[...],
                         preferred_element_type=jnp.float32).astype(o_ref.dtype)


# ---------- phase 1: Xe = (H @ XW) * (inv_cnt * degE) ----------
def _edge_kernel_fused(h_ref, x_ref, w_ref, se_ref, o_ref, acc_ref):
    # Projection fused: XW n-tile computed on the fly, W resident in VMEM.
    @pl.when(pl.program_id(1) == 0)
    def _init():
        acc_ref[...] = jnp.zeros_like(acc_ref)

    xw = jnp.dot(x_ref[...], w_ref[...], preferred_element_type=jnp.float32)
    acc_ref[...] += jnp.dot(h_ref[...], xw.astype(jnp.bfloat16),
                            preferred_element_type=jnp.float32)

    @pl.when(pl.program_id(1) == pl.num_programs(1) - 1)
    def _finalize():
        o_ref[...] = (acc_ref[...] * se_ref[...]).astype(o_ref.dtype)


def _edge_kernel(h_ref, xw_ref, se_ref, o_ref, acc_ref):
    # bf16 H x bf16 XW -> f32 accumulator.
    @pl.when(pl.program_id(1) == 0)
    def _init():
        acc_ref[...] = jnp.zeros_like(acc_ref)

    acc_ref[...] += jnp.dot(h_ref[...], xw_ref[...],
                            preferred_element_type=jnp.float32)

    @pl.when(pl.program_id(1) == pl.num_programs(1) - 1)
    def _finalize():
        o_ref[...] = (acc_ref[...] * se_ref[...]).astype(o_ref.dtype)


# ---------- phase 2: Xv = (H^T @ Xe) * degV  (+ optional L2 row-norm) ----------
def _vertex_kernel(use_norm, ht_ref, xe_ref, dv_ref, o_ref, acc_ref):
    @pl.when(pl.program_id(1) == 0)
    def _init():
        acc_ref[...] = jnp.zeros_like(acc_ref)

    acc_ref[...] += jnp.dot(ht_ref[...], xe_ref[...],
                            preferred_element_type=jnp.float32)

    @pl.when(pl.program_id(1) == pl.num_programs(1) - 1)
    def _finalize():
        xv = acc_ref[...] * dv_ref[...]          # exact ref semantics, any degV
        if use_norm:
            ssq = jnp.sum(xv * xv, axis=1, keepdims=True)
            xv = xv * jnp.where(ssq > 0.0, lax.rsqrt(ssq), 0.0)
        o_ref[...] = xv.astype(o_ref.dtype)


def unigcn_conv(X, W_t, graph, use_norm=True, fuse_projection=None):
    N, C_in = X.shape
    D = W_t.shape[1]
    assert N == graph["N"]
    N_pad, E_pad = graph["N_pad"], graph["E_pad"]
    TN, TE, D_pad = graph["TN"], graph["TE"], graph["D_pad"]
    assert D <= D_pad

    bf16 = jnp.bfloat16
    Xp = jnp.zeros((N_pad, C_in), bf16).at[:N].set(X.astype(bf16))
    Wp = jnp.zeros((C_in, D_pad), bf16).at[:, :D].set(W_t.astype(bf16))

    if fuse_projection is None:
        fuse_projection = C_in <= D_pad

    cparams2 = pltpu.CompilerParams(
        dimension_semantics=("parallel", "arbitrary"),
        vmem_limit_bytes=graph["vmem_limit"])

    if fuse_projection:
        xe = pl.pallas_call(
            _edge_kernel_fused,
            out_shape=jax.ShapeDtypeStruct((E_pad, D_pad), bf16),
            grid=(E_pad // TE, N_pad // TN),
            in_specs=[pl.BlockSpec((TE, TN), lambda e, n: (e, n)),
                      pl.BlockSpec((TN, C_in), lambda e, n: (n, 0)),
                      pl.BlockSpec((C_in, D_pad), lambda e, n: (0, 0)),
                      pl.BlockSpec((TE, 1), lambda e, n: (e, 0))],
            out_specs=pl.BlockSpec((TE, D_pad), lambda e, n: (e, 0)),
            scratch_shapes=[pltpu.VMEM((TE, D_pad), jnp.float32)],
            compiler_params=cparams2,
        )(graph["Hp"], Xp, Wp, graph["SEp"])
    else:
        xw = pl.pallas_call(
            _proj_kernel,
            out_shape=jax.ShapeDtypeStruct((N_pad, D_pad), bf16),
            grid=(N_pad // TN,),
            in_specs=[pl.BlockSpec((TN, C_in), lambda i: (i, 0)),
                      pl.BlockSpec((C_in, D_pad), lambda i: (0, 0))],
            out_specs=pl.BlockSpec((TN, D_pad), lambda i: (i, 0)),
            compiler_params=pltpu.CompilerParams(
                dimension_semantics=("parallel",),
                vmem_limit_bytes=graph["vmem_limit"]),
        )(Xp, Wp)
        xe = pl.pallas_call(
            _edge_kernel,
            out_shape=jax.ShapeDtypeStruct((E_pad, D_pad), bf16),
            grid=(E_pad // TE, N_pad // TN),
            in_specs=[pl.BlockSpec((TE, TN), lambda e, n: (e, n)),
                      pl.BlockSpec((TN, D_pad), lambda e, n: (n, 0)),
                      pl.BlockSpec((TE, 1), lambda e, n: (e, 0))],
            out_specs=pl.BlockSpec((TE, D_pad), lambda e, n: (e, 0)),
            scratch_shapes=[pltpu.VMEM((TE, D_pad), jnp.float32)],
            compiler_params=cparams2,
        )(graph["Hp"], xw, graph["SEp"])

    out = pl.pallas_call(
        functools.partial(_vertex_kernel, use_norm),
        out_shape=jax.ShapeDtypeStruct((N_pad, D_pad), X.dtype),
        grid=(N_pad // TN, E_pad // TE),
        in_specs=[pl.BlockSpec((TN, TE), lambda n, e: (n, e)),
                  pl.BlockSpec((TE, D_pad), lambda n, e: (e, 0)),
                  pl.BlockSpec((TN, 1), lambda n, e: (n, 0))],
        out_specs=pl.BlockSpec((TN, D_pad), lambda n, e: (n, 0)),
        scratch_shapes=[pltpu.VMEM((TN, D_pad), jnp.float32)],
        compiler_params=cparams2,
    )(graph["Htp"], xe, graph["DVp"])

    return out[:N, :D]


# ----------------------------- test harness -----------------------------
def _build_graph(key, N, E, nnz):
    kv, ke = jax.random.split(key)
    vertex = jax.random.randint(kv, (nnz,), 0, N)
    edges = jax.random.randint(ke, (nnz,), 0, E)
    H = jnp.zeros((E, N), jnp.float32).at[edges, vertex].add(1.0)
    cnt_e = H.sum(axis=1, keepdims=True)
    inv_cnt = jnp.where(cnt_e > 0, 1.0 / jnp.maximum(cnt_e, 1.0), 0.0)
    deg_v_raw = H.sum(axis=0)[:, None]
    degV = jnp.where(deg_v_raw > 0, deg_v_raw ** -0.5, 1.0)
    mean_dv = jnp.where(cnt_e > 0, (H @ deg_v_raw) / jnp.maximum(cnt_e, 1.0), 0.0)
    degE = jnp.where(mean_dv > 0, mean_dv ** -0.5, 0.0)
    return vertex, edges, H, inv_cnt, degE, degV


def _reference(X, W_t, vertex, edges, N, E, degE, degV, use_norm):
    XW = X @ W_t
    Xve = XW[vertex]
    sums = jax.ops.segment_sum(Xve, edges, num_segments=E)
    cnt = jax.ops.segment_sum(jnp.ones(edges.shape, jnp.float32), edges,
                              num_segments=E)
    Xe = jnp.where(cnt[:, None] > 0, sums / jnp.maximum(cnt[:, None], 1.0), 0.0)
    Xe = Xe * degE
    Xev = Xe[edges]
    Xv = jax.ops.segment_sum(Xev, vertex, num_segments=N) * degV
    if use_norm:
        rn = jnp.linalg.norm(Xv, axis=1, keepdims=True)
        Xv = Xv * jnp.where(rn > 0, 1.0 / rn, 0.0)
    return Xv


if __name__ == "__main__":
    # bf16 operands / intermediates -> compare with loosened tolerances.
    ATOL = RTOL = 3e-2

    # --- config A: small C_in -> fused-projection path ---
    key = jax.random.PRNGKey(0)
    N, E, nnz = 16, 8, 24
    in_channels, heads, out_channels = 32, 8, 4
    D = heads * out_channels
    k1, k2, kg = jax.random.split(key, 3)
    X = jax.random.normal(k1, (N, in_channels), jnp.float32)
    bound = 1.0 / (in_channels ** 0.5)
    W = jax.random.uniform(k2, (D, in_channels), jnp.float32, -bound, bound)
    W_t = W.T
    vertex, edges, H, inv_cnt, degE, degV = _build_graph(kg, N, E, nnz)
    graph = prepare_unigcn_graph(H, inv_cnt, degE, degV, d_out=D, c_in=in_channels)

    for use_norm in (True, False):
        out = jax.block_until_ready(unigcn_conv(X, W_t, graph, use_norm=use_norm))
        ref = _reference(X, W_t, vertex, edges, N, E, degE, degV, use_norm)
        err = float(jnp.abs(out - ref).max())
        assert jnp.allclose(out, ref, atol=ATOL, rtol=RTOL), (use_norm, err)

    # --- config B: large C_in -> separate projection kernel (non-fused path) ---
    N2, E2, nnz2 = 24, 12, 40
    in2, heads2, out2 = 256, 4, 8
    D2 = heads2 * out2
    k3, k4, kg2 = jax.random.split(jax.random.PRNGKey(1), 3)
    X2 = jax.random.normal(k3, (N2, in2), jnp.float32)
    b2 = 1.0 / (in2 ** 0.5)
    W2 = jax.random.uniform(k4, (D2, in2), jnp.float32, -b2, b2)
    W2_t = W2.T
    v2, e2, H2, ic2, dE2, dV2 = _build_graph(kg2, N2, E2, nnz2)
    graph2 = prepare_unigcn_graph(H2, ic2, dE2, dV2, d_out=D2, c_in=in2)
    out_b = jax.block_until_ready(unigcn_conv(X2, W2_t, graph2, use_norm=True))
    ref_b = _reference(X2, W2_t, v2, e2, N2, E2, dE2, dV2, True)
    err_b = float(jnp.abs(out_b - ref_b).max())
    assert jnp.allclose(out_b, ref_b, atol=ATOL, rtol=RTOL), err_b

    print("KERNEL_OK")
</pallas_src>

<mosaic_0001>
module attributes {stable_mosaic.version = 11 : i64} {
  func.func @_edge_kernel_fused(%arg0: i32, %arg1: i32, %arg2: memref<128x128xbf16, #tpu.memory_space<vmem>>, %arg3: memref<128x32xbf16, #tpu.memory_space<vmem>>, %arg4: memref<32x128xbf16, #tpu.memory_space<vmem>>, %arg5: memref<128x1xf32, #tpu.memory_space<vmem>>, %arg6: memref<128x128xbf16, #tpu.memory_space<vmem>>, %arg7: memref<128x128xf32, #tpu.memory_space<vmem>>) attributes {dimension_semantics = [#tpu.dimension_semantics<parallel>, #tpu.dimension_semantics<arbitrary>], iteration_bounds = array<i64: 1, 1>, scalar_prefetch = 0 : i64, scratch_operands = 1 : i64, tpu.core_type = #tpu.core_type<tc>, window_params = [{transform_indices = @transform_0, window_bounds = array<i64: 128, 128>}, {transform_indices = @transform_1, window_bounds = array<i64: 128, 32>}, {pipeline_mode = #tpu.pipeline_mode<synchronous>, transform_indices = @transform_2, window_bounds = array<i64: 32, 128>}, {transform_indices = @transform_3, window_bounds = array<i64: 128, 1>}, {transform_indices = @transform_4, window_bounds = array<i64: 128, 128>}]} {
    %c0_i32 = arith.constant 0 : i32
    %0 = arith.cmpi eq, %arg1, %c0_i32 : i32
    %1 = arith.extui %0 : i1 to i32
    %c0_i32_0 = arith.constant 0 : i32
    %2 = arith.cmpi ne, %1, %c0_i32_0 : i32
    scf.if %2 {
      %cst_13 = arith.constant 0.000000e+00 : f32
      %15 = vector.broadcast %cst_13 : f32 to vector<128x128xf32>
      %c0_14 = arith.constant 0 : index
      %c0_15 = arith.constant 0 : index
      %16 = vector.load %arg7[%c0_14, %c0_15] : memref<128x128xf32, #tpu.memory_space<vmem>>, vector<128x128xf32>
      tpu.vector_store %arg7[%c0_14, %c0_15], %15 {strides = array<i32>} : memref<128x128xf32, #tpu.memory_space<vmem>>, vector<128x128xf32>,
    } else {
    }
    %c0 = arith.constant 0 : index
    %c0_1 = arith.constant 0 : index
    %3 = vector.load %arg3[%c0, %c0_1] : memref<128x32xbf16, #tpu.memory_space<vmem>>, vector<128x32xbf16>
    %c0_2 = arith.constant 0 : index
    %c0_3 = arith.constant 0 : index
    %4 = vector.load %arg4[%c0_2, %c0_3] : memref<32x128xbf16, #tpu.memory_space<vmem>>, vector<32x128xbf16>
    %cst = arith.constant dense<0.000000e+00> : vector<128x128xf32>
    %5 = tpu.matmul %3, %4, %cst {dimension_numbers = #tpu.dot_dimension_numbers<[1], [0], [0], [1], [0, 0, 1, 1], [], []>} : vector<128x32xbf16>, vector<32x128xbf16>, vector<128x128xf32> -> vector<128x128xf32>
    %c0_4 = arith.constant 0 : index
    %c0_5 = arith.constant 0 : index
    %6 = vector.load %arg7[%c0_4, %c0_5] : memref<128x128xf32, #tpu.memory_space<vmem>>, vector<128x128xf32>
    %c0_6 = arith.constant 0 : index
    %c0_7 = arith.constant 0 : index
    %7 = vector.load %arg2[%c0_6, %c0_7] : memref<128x128xbf16, #tpu.memory_space<vmem>>, vector<128x128xbf16>
    %8 = arith.truncf %5 : vector<128x128xf32> to vector<128x128xbf16>
    %cst_8 = arith.constant dense<0.000000e+00> : vector<128x128xf32>
    %9 = tpu.matmul %7, %8, %cst_8 {dimension_numbers = #tpu.dot_dimension_numbers<[1], [0], [0], [1], [0, 0, 1, 1], [], []>} : vector<128x128xbf16>, vector<128x128xbf16>, vector<128x128xf32> -> vector<128x128xf32>
    %10 = arith.addf %6, %9 : vector<128x128xf32>
    %c0_9 = arith.constant 0 : index
    %c0_10 = arith.constant 0 : index
    %11 = vector.load %arg7[%c0_9, %c0_10] : memref<128x128xf32, #tpu.memory_space<vmem>>, vector<128x128xf32>
    tpu.vector_store %arg7[%c0_9, %c0_10], %10 {strides = array<i32>} : memref<128x128xf32, #tpu.memory_space<vmem>>, vector<128x128xf32>,
    %c0_i32_11 = arith.constant 0 : i32
    %12 = arith.cmpi eq, %arg1, %c0_i32_11 : i32
    %13 = arith.extui %12 : i1 to i32
    %c0_i32_12 = arith.constant 0 : i32
    %14 = arith.cmpi ne, %13, %c0_i32_12 : i32
    scf.if %14 {
      %c0_13 = arith.constant 0 : index
      %c0_14 = arith.constant 0 : index
      %15 = vector.load %arg7[%c0_13, %c0_14] : memref<128x128xf32, #tpu.memory_space<vmem>>, vector<128x128xf32>
      %c0_15 = arith.constant 0 : index
      %c0_16 = arith.constant 0 : index
      %16 = vector.load %arg5[%c0_15, %c0_16] : memref<128x1xf32, #tpu.memory_space<vmem>>, vector<128x1xf32>
      %17 = vector.broadcast %16 : vector<128x1xf32> to vector<128x128xf32>
      %18 = arith.mulf %15, %17 : vector<128x128xf32>
      %19 = arith.truncf %18 : vector<128x128xf32> to vector<128x128xbf16>
      %c0_17 = arith.constant 0 : index
      %c0_18 = arith.constant 0 : index
      %20 = vector.load %arg6[%c0_17, %c0_18] : memref<128x128xbf16, #tpu.memory_space<vmem>>, vector<128x128xbf16>
      tpu.vector_store %arg6[%c0_17, %c0_18], %19 {strides = array<i32>} : memref<128x128xbf16, #tpu.memory_space<vmem>>, vector<128x128xbf16>,
    } else {
    }
    return
  }
  func.func @transform_0(%arg0: i32, %arg1: i32) -> (i32, i32) {
    %c0_i32 = arith.constant 0 : i32
    return %arg0, %arg1 : i32, i32
  }
  func.func @transform_1(%arg0: i32, %arg1: i32) -> (i32, i32) {
    %c0_i32 = arith.constant 0 : i32
    %c0_i32_0 = arith.constant 0 : i32
    return %arg1, %c0_i32 : i32, i32
  }
  func.func @transform_2(%arg0: i32, %arg1: i32) -> (i32, i32) {
    %c0_i32 = arith.constant 0 : i32
    %c0_i32_0 = arith.constant 0 : i32
    %c0_i32_1 = arith.constant 0 : i32
    return %c0_i32, %c0_i32_0 : i32, i32
  }
  func.func @transform_3(%arg0: i32, %arg1: i32) -> (i32, i32) {
    %c0_i32 = arith.constant 0 : i32
    %c0_i32_0 = arith.constant 0 : i32
    return %arg0, %c0_i32 : i32, i32
  }
  func.func @transform_4(%arg0: i32, %arg1: i32) -> (i32, i32) {
    %c0_i32 = arith.constant 0 : i32
    %c0_i32_0 = arith.constant 0 : i32
    return %arg0, %c0_i32 : i32, i32
  }
}

</mosaic_0001>

<llo_original>
// kernel: tpu_custom_call.1
$region0: #{tpu_custom_call.1}
  #allocation0 [shape = 'u32[]', space=smem, size = 0x4, offset = 0x4, fixed_abs, tag = 'smem constant byte address 0x4 - core index']
  #allocation1 [shape = 'u32[72,128]{1,0:T(1,128)}', space=vmem, size = 0x9000, scoped, tag = 'internal scratch']
  #allocation2 [shape = 'f32[128,128]{1,0:T(8,128)}', space=vmem, size = 0x10000, scoped, tag = 'scratch operand']
  %s0 = inlined_call_operand.vmem [shape: bf16[128,128], index: 0, kind: input, shape index: {}]
  %s1 = inlined_call_operand.vmem [shape: bf16[128,32], index: 1, kind: input, shape index: {}]
  %s2 = inlined_call_operand.vmem [shape: bf16[32,128], index: 2, kind: input, shape index: {}]
  %s3 = inlined_call_operand.vmem [shape: f32[128,1], index: 3, kind: input, shape index: {}]
  %s4 = inlined_call_operand.hbm [shape: bf16[128,128], index: 4, kind: output, shape index: {}]
  %s5 = sld [smem:[#allocation0]]
  $region34: #{tpu_custom_call.1} parent=0
    _
  %s7 = ssub.s32 1, %s5
  %s8 = scalar_select 0, %s7, %s5
  $region1: #{tpu_custom_call.1} parent=0
    #allocation3 [shape = 'u8[32768]{0}', space=vmem, size = 0x8000, scoped, tag = 'output window, operand 0, single buffered']
    #allocation4 [shape = 's32[1]{0}', space=sflag, size = 0x4, scoped, tag = 'scoped memory for tpu_custom_call.1']
    %9 = vsyncpa [#allocation4], 0
    // Predicated region
    $region2: #{tpu_custom_call.1} parent=1 // pred_check
      _
    $region3: #{tpu_custom_call.1} parent=1 // pred_check_branch
      %11 = sbr.rel (0) target = $region5
    $region4: #{tpu_custom_call.1} parent=1 // pred_region
      _
    $region5: #{tpu_custom_call.1} parent=1 // pred_fallthru
      _
    // Predicated region
    $region6: #{tpu_custom_call.1} parent=1 // pred_check
      _
    $region7: #{tpu_custom_call.1} parent=1 // pred_check_branch
      %13 = sbr.rel (0) target = $region9
    $region8: #{tpu_custom_call.1} parent=1 // pred_region
      _
    $region9: #{tpu_custom_call.1} parent=1 // pred_fallthru
      _
    // Predicated region
    $region10: #{tpu_custom_call.1} parent=1 // pred_check
      _
    $region11: #{tpu_custom_call.1} parent=1 // pred_check_branch
      %15 = sbr.rel (0) target = $region13
    $region12: #{tpu_custom_call.1} parent=1 // pred_region
      _
    $region13: #{tpu_custom_call.1} parent=1 // pred_fallthru
      _
    // Predicated region
    $region14: #{tpu_custom_call.1} parent=1 // pred_check
      _
    $region15: #{tpu_custom_call.1} parent=1 // pred_check_branch
      %17 = sbr.rel (0) target = $region17
    $region16: #{tpu_custom_call.1} parent=1 // pred_region
      _
    $region17: #{tpu_custom_call.1} parent=1 // pred_fallthru
      _
    %p19 = scmp.eq.s32.totalorder 0, 0
    // Predicated region
    $region18: #{tpu_custom_call.1} parent=1 // pred_check
      %p20 = pneg %p19
    $region19: #{tpu_custom_call.1} parent=1 // pred_check_branch
      %22 = sbr.rel (%p20) target = $region21
    $region20: #{tpu_custom_call.1} parent=1 // pred_region
      %23 = vst [vmem:[#allocation2] sm:$0xff] 0.0
      %24 = vst [vmem:[#allocation2 + $0x8] sm:$0xff] 0.0
      %25 = vst [vmem:[#allocation2 + $0x10] sm:$0xff] 0.0
      %26 = vst [vmem:[#allocation2 + $0x18] sm:$0xff] 0.0
      %27 = vst [vmem:[#allocation2 + $0x20] sm:$0xff] 0.0
      %28 = vst [vmem:[#allocation2 + $0x28] sm:$0xff] 0.0
      %29 = vst [vmem:[#allocation2 + $0x30] sm:$0xff] 0.0
      %30 = vst [vmem:[#allocation2 + $0x38] sm:$0xff] 0.0
      %31 = vst [vmem:[#allocation2 + $0x40] sm:$0xff] 0.0
      %32 = vst [vmem:[#allocation2 + $0x48] sm:$0xff] 0.0
      %33 = vst [vmem:[#allocation2 + $0x50] sm:$0xff] 0.0
      %34 = vst [vmem:[#allocation2 + $0x58] sm:$0xff] 0.0
      %35 = vst [vmem:[#allocation2 + $0x60] sm:$0xff] 0.0
      %36 = vst [vmem:[#allocation2 + $0x68] sm:$0xff] 0.0
      %37 = vst [vmem:[#allocation2 + $0x70] sm:$0xff] 0.0
      %38 = vst [vmem:[#allocation2 + $0x78] sm:$0xff] 0.0
    $region21: #{tpu_custom_call.1} parent=1 // pred_fallthru
      _
    %v39 = vld [vmem:[%s1] sm:$0xf]
    %v40 = vld [vmem:[%s1 + $0x4] sm:$0xf]
    %v41 = vld [vmem:[%s1 + $0x8] sm:$0xf]
    %v42 = vld [vmem:[%s1 + $0xc] sm:$0xf]
    %v43 = vld [vmem:[%s1 + $0x10] sm:$0xf]
    %v44 = vld [vmem:[%s1 + $0x14] sm:$0xf]
    %v45 = vld [vmem:[%s1 + $0x18] sm:$0xf]
    %v46 = vld [vmem:[%s1 + $0x1c] sm:$0xf]
    %v47 = vld [vmem:[%s1 + $0x20] sm:$0xf]
    %v48 = vld [vmem:[%s1 + $0x24] sm:$0xf]
    %v49 = vld [vmem:[%s1 + $0x28] sm:$0xf]
    %v50 = vld [vmem:[%s1 + $0x2c] sm:$0xf]
    %v51 = vld [vmem:[%s1 + $0x30] sm:$0xf]
    %v52 = vld [vmem:[%s1 + $0x34] sm:$0xf]
    %v53 = vld [vmem:[%s1 + $0x38] sm:$0xf]
    %v54 = vld [vmem:[%s1 + $0x3c] sm:$0xf]
    %v55 = vld [vmem:[%s2] sm:$0xf]
    %v56 = vld [vmem:[%s2 + $0x4] sm:$0xf]
    %v57 = vld [vmem:[%s2 + $0x8] sm:$0xf]
    %v58 = vld [vmem:[%s2 + $0xc] sm:$0xf]
    %v75 = vunpack.c.l.b16 %v39
    %v76 = vunpack.c.l.b16 %v40
    %v77 = vunpack.c.l.b16 %v41
    %v78 = vunpack.c.l.b16 %v42
    %v79 = vunpack.c.l.b16 %v43
    %v80 = vunpack.c.l.b16 %v44
    %v81 = vunpack.c.l.b16 %v45
    %v82 = vunpack.c.l.b16 %v46
    %v83 = vunpack.c.l.b16 %v47
    %v84 = vunpack.c.l.b16 %v48
    %v85 = vunpack.c.l.b16 %v49
    %v86 = vunpack.c.l.b16 %v50
    %v87 = vunpack.c.l.b16 %v51
    %v88 = vunpack.c.l.b16 %v52
    %v89 = vunpack.c.l.b16 %v53
    %v90 = vunpack.c.l.b16 %v54
    %v91 = vpack.c.b16 %v76, %v75
    %v92 = vpack.c.b16 %v78, %v77
    %v93 = vpack.c.b16 %v80, %v79
    %v94 = vpack.c.b16 %v82, %v81
    %v95 = vpack.c.b16 %v84, %v83
    %v96 = vpack.c.b16 %v86, %v85
    %v97 = vpack.c.b16 %v88, %v87
    %v98 = vpack.c.b16 %v90, %v89
    %v103 = vunpack.c.l.b16 %v55
    %v104 = vunpack.c.l.b16 %v56
    %v105 = vunpack.c.l.b16 %v57
    %v106 = vunpack.c.l.b16 %v58
    %v107 = vpack.c.b16 %v104, %v103
    %v108 = vpack.c.b16 %v106, %v105
    %vm111 = vcmask 261120
    %v113 = vsel %vm111, %v91, 0
    %v116 = vsel %vm111, %v92, 0
    %v119 = vsel %vm111, %v93, 0
    %v122 = vsel %vm111, %v94, 0
    %v125 = vsel %vm111, %v95, 0
    %v128 = vsel %vm111, %v96, 0
    %v131 = vsel %vm111, %v97, 0
    %v134 = vsel %vm111, %v98, 0
    %136 = vmatpush.bf16.msra.mxu0 0
    %137 = vmatpush.bf16.msra.mxu0 0
    %138 = vmatpush.bf16.msra.mxu0 0
    %139 = vmatpush.bf16.msra.mxu0 0
    %140 = vmatpush.bf16.msra.mxu0 0
    %141 = vmatpush.bf16.msra.mxu0 0
    %142 = vmatpush.bf16.msra.mxu0 %v108
    %143 = vmatpush.bf16.msra.mxu0 %v107
    %144 = vmatmul.bf16.gmra.mxu0 %v113
    %v145 = vpop.f32.mrf.mxu0
    %v146 = vadd.f32 0.0, %v145
    %v147 = vpop.f32.mrf.mxu0
    %v148 = vadd.f32 0.0, %v147
    %149 = vmatmul.bf16.gmra.mxu0 %v116
    %v150 = vpop.f32.mrf.mxu0
    %v151 = vadd.f32 0.0, %v150
    %v152 = vpop.f32.mrf.mxu0
    %v153 = vadd.f32 0.0, %v152
    %154 = vmatmul.bf16.gmra.mxu0 %v119
    %v155 = vpop.f32.mrf.mxu0
    %v156 = vadd.f32 0.0, %v155
    %v157 = vpop.f32.mrf.mxu0
    %v158 = vadd.f32 0.0, %v157
    %159 = vmatmul.bf16.gmra.mxu0 %v122
    %v160 = vpop.f32.mrf.mxu0
    %v161 = vadd.f32 0.0, %v160
    %v162 = vpop.f32.mrf.mxu0
    %v163 = vadd.f32 0.0, %v162
    %164 = vmatmul.bf16.gmra.mxu0 %v125
    %v165 = vpop.f32.mrf.mxu0
    %v166 = vadd.f32 0.0, %v165
    %v167 = vpop.f32.mrf.mxu0
    %v168 = vadd.f32 0.0, %v167
    %169 = vmatmul.bf16.gmra.mxu0 %v128
    %v170 = vpop.f32.mrf.mxu0
    %v171 = vadd.f32 0.0, %v170
    %v172 = vpop.f32.mrf.mxu0
    %v173 = vadd.f32 0.0, %v172
    %174 = vmatmul.bf16.gmra.mxu0 %v131
    %v175 = vpop.f32.mrf.mxu0
    %v176 = vadd.f32 0.0, %v175
    %v177 = vpop.f32.mrf.mxu0
    %v178 = vadd.f32 0.0, %v177
    %179 = vmatmul.bf16.gmra.mxu0 %v134
    %v180 = vpop.f32.mrf.mxu0
    %v181 = vadd.f32 0.0, %v180
    %v182 = vpop.f32.mrf.mxu0
    %v183 = vadd.f32 0.0, %v182
    %184 = vdwg.mxu0
    %v185 = vld [vmem:[#allocation2] sm:$0xff]
    %v186 = vld [vmem:[#allocation2 + $0x8] sm:$0xff]
    %v187 = vld [vmem:[#allocation2 + $0x10] sm:$0xff]
    %v188 = vld [vmem:[#allocation2 + $0x18] sm:$0xff]
    %v189 = vld [vmem:[#allocation2 + $0x20] sm:$0xff]
    %v190 = vld [vmem:[#allocation2 + $0x28] sm:$0xff]
    %v191 = vld [vmem:[#allocation2 + $0x30] sm:$0xff]
    %v192 = vld [vmem:[#allocation2 + $0x38] sm:$0xff]
    %v193 = vld [vmem:[#allocation2 + $0x40] sm:$0xff]
    %v194 = vld [vmem:[#allocation2 + $0x48] sm:$0xff]
    %v195 = vld [vmem:[#allocation2 + $0x50] sm:$0xff]
    %v196 = vld [vmem:[#allocation2 + $0x58] sm:$0xff]
    %v197 = vld [vmem:[#allocation2 + $0x60] sm:$0xff]
    %v198 = vld [vmem:[#allocation2 + $0x68] sm:$0xff]
    %v199 = vld [vmem:[#allocation2 + $0x70] sm:$0xff]
    %v200 = vld [vmem:[#allocation2 + $0x78] sm:$0xff]
    %v201 = vld [vmem:[%s0] sm:$0xf]
    %v202 = vld [vmem:[%s0 + $0x4] sm:$0xf]
    %v203 = vld [vmem:[%s0 + $0x8] sm:$0xf]
    %v204 = vld [vmem:[%s0 + $0xc] sm:$0xf]
    %v205 = vld [vmem:[%s0 + $0x10] sm:$0xf]
    %v206 = vld [vmem:[%s0 + $0x14] sm:$0xf]
    %v207 = vld [vmem:[%s0 + $0x18] sm:$0xf]
    %v208 = vld [vmem:[%s0 + $0x1c] sm:$0xf]
    %v209 = vld [vmem:[%s0 + $0x20] sm:$0xf]
    %v210 = vld [vmem:[%s0 + $0x24] sm:$0xf]
    %v211 = vld [vmem:[%s0 + $0x28] sm:$0xf]
    %v212 = vld [vmem:[%s0 + $0x2c] sm:$0xf]
    %v213 = vld [vmem:[%s0 + $0x30] sm:$0xf]
    %v214 = vld [vmem:[%s0 + $0x34] sm:$0xf]
    %v215 = vld [vmem:[%s0 + $0x38] sm:$0xf]
    %v216 = vld [vmem:[%s0 + $0x3c] sm:$0xf]
    %v217 = vpack.c.bf16 %v148, %v146
    %v218 = vpack.c.bf16 %v153, %v151
    %v219 = vpack.c.bf16 %v158, %v156
    %v220 = vpack.c.bf16 %v163, %v161
    %v221 = vpack.c.bf16 %v168, %v166
    %v222 = vpack.c.bf16 %v173, %v171
    %v223 = vpack.c.bf16 %v178, %v176
    %v224 = vpack.c.bf16 %v183, %v181
    %v241 = vunpack.c.l.b16 %v201
    %v242 = vunpack.c.l.b16 %v202
    %v243 = vunpack.c.l.b16 %v203
    %v244 = vunpack.c.l.b16 %v204
    %v245 = vunpack.c.l.b16 %v205
    %v246 = vunpack.c.l.b16 %v206
    %v247 = vunpack.c.l.b16 %v207
    %v248 = vunpack.c.l.b16 %v208
    %v249 = vunpack.c.l.b16 %v209
    %v250 = vunpack.c.l.b16 %v210
    %v251 = vunpack.c.l.b16 %v211
    %v252 = vunpack.c.l.b16 %v212
    %v253 = vunpack.c.l.b16 %v213
    %v254 = vunpack.c.l.b16 %v214
    %v255 = vunpack.c.l.b16 %v215
    %v256 = vunpack.c.l.b16 %v216
    %v257 = vpack.c.b16 %v242, %v241
    %v258 = vpack.c.b16 %v244, %v243
    %v259 = vpack.c.b16 %v246, %v245
    %v260 = vpack.c.b16 %v248, %v247
    %v261 = vpack.c.b16 %v250, %v249
    %v262 = vpack.c.b16 %v252, %v251
    %v263 = vpack.c.b16 %v254, %v253
    %v264 = vpack.c.b16 %v256, %v255
    %273 = vmatpush.bf16.msra.mxu0 %v224
    %274 = vmatpush.bf16.msra.mxu0 %v223
    %275 = vmatpush.bf16.msra.mxu0 %v222
    %276 = vmatpush.bf16.msra.mxu0 %v221
    %277 = vmatpush.bf16.msra.mxu0 %v220
    %278 = vmatpush.bf16.msra.mxu0 %v219
    %279 = vmatpush.bf16.msra.mxu0 %v218
    %280 = vmatpush.bf16.msra.mxu0 %v217
    %281 = vmatmul.bf16.gmra.mxu0 %v257
    %v282 = vpop.f32.mrf.mxu0
    %v283 = vadd.f32 0.0, %v282
    %v284 = vpop.f32.mrf.mxu0
    %v285 = vadd.f32 0.0, %v284
    %286 = vmatmul.bf16.gmra.mxu0 %v258
    %v287 = vpop.f32.mrf.mxu0
    %v288 = vadd.f32 0.0, %v287
    %v289 = vpop.f32.mrf.mxu0
    %v290 = vadd.f32 0.0, %v289
    %291 = vmatmul.bf16.gmra.mxu0 %v259
    %v292 = vpop.f32.mrf.mxu0
    %v293 = vadd.f32 0.0, %v292
    %v294 = vpop.f32.mrf.mxu0
    %v295 = vadd.f32 0.0, %v294
    %296 = vmatmul.bf16.gmra.mxu0 %v260
    %v297 = vpop.f32.mrf.mxu0
    %v298 = vadd.f32 0.0, %v297
    %v299 = vpop.f32.mrf.mxu0
    %v300 = vadd.f32 0.0, %v299
    %301 = vmatmul.bf16.gmra.mxu0 %v261
    %v302 = vpop.f32.mrf.mxu0
    %v303 = vadd.f32 0.0, %v302
    %v304 = vpop.f32.mrf.mxu0
    %v305 = vadd.f32 0.0, %v304
    %306 = vmatmul.bf16.gmra.mxu0 %v262
    %v307 = vpop.f32.mrf.mxu0
    %v308 = vadd.f32 0.0, %v307
    %v309 = vpop.f32.mrf.mxu0
    %v310 = vadd.f32 0.0, %v309
    %311 = vmatmul.bf16.gmra.mxu0 %v263
    %v312 = vpop.f32.mrf.mxu0
    %v313 = vadd.f32 0.0, %v312
    %v314 = vpop.f32.mrf.mxu0
    %v315 = vadd.f32 0.0, %v314
    %316 = vmatmul.bf16.gmra.mxu0 %v264
    %v317 = vpop.f32.mrf.mxu0
    %v318 = vadd.f32 0.0, %v317
    %v319 = vpop.f32.mrf.mxu0
    %v320 = vadd.f32 0.0, %v319
    %321 = vdwg.mxu0
    %v322 = vadd.f32 %v185, %v283
    %v323 = vadd.f32 %v186, %v285
    %v324 = vadd.f32 %v187, %v288
    %v325 = vadd.f32 %v188, %v290
    %v326 = vadd.f32 %v189, %v293
    %v327 = vadd.f32 %v190, %v295
    %v328 = vadd.f32 %v191, %v298
    %v329 = vadd.f32 %v192, %v300
    %v330 = vadd.f32 %v193, %v303
    %v331 = vadd.f32 %v194, %v305
    %v332 = vadd.f32 %v195, %v308
    %v333 = vadd.f32 %v196, %v310
    %v334 = vadd.f32 %v197, %v313
    %v335 = vadd.f32 %v198, %v315
    %v336 = vadd.f32 %v199, %v318
    %v337 = vadd.f32 %v200, %v320
    %338 = vst [vmem:[#allocation2] sm:$0xff] %v322
    %339 = vst [vmem:[#allocation2 + $0x8] sm:$0xff] %v323
    %340 = vst [vmem:[#allocation2 + $0x10] sm:$0xff] %v324
    %341 = vst [vmem:[#allocation2 + $0x18] sm:$0xff] %v325
    %342 = vst [vmem:[#allocation2 + $0x20] sm:$0xff] %v326
    %343 = vst [vmem:[#allocation2 + $0x28] sm:$0xff] %v327
    %344 = vst [vmem:[#allocation2 + $0x30] sm:$0xff] %v328
    %345 = vst [vmem:[#allocation2 + $0x38] sm:$0xff] %v329
    %346 = vst [vmem:[#allocation2 + $0x40] sm:$0xff] %v330
    %347 = vst [vmem:[#allocation2 + $0x48] sm:$0xff] %v331
    %348 = vst [vmem:[#allocation2 + $0x50] sm:$0xff] %v332
    %349 = vst [vmem:[#allocation2 + $0x58] sm:$0xff] %v333
    %350 = vst [vmem:[#allocation2 + $0x60] sm:$0xff] %v334
    %351 = vst [vmem:[#allocation2 + $0x68] sm:$0xff] %v335
    %352 = vst [vmem:[#allocation2 + $0x70] sm:$0xff] %v336
    %353 = vst [vmem:[#allocation2 + $0x78] sm:$0xff] %v337
    // Predicated region
    $region22: #{tpu_custom_call.1} parent=1 // pred_check
      %p354 = pneg %p19
    $region23: #{tpu_custom_call.1} parent=1 // pred_check_branch
      %356 = sbr.rel (%p354) target = $region25
    $region24: #{tpu_custom_call.1} parent=1 // pred_region
      %v357 = vld [vmem:[#allocation2] sm:$0xff]
      %v358 = vld [vmem:[#allocation2 + $0x8] sm:$0xff]
      %v359 = vld [vmem:[#allocation2 + $0x10] sm:$0xff]
      %v360 = vld [vmem:[#allocation2 + $0x18] sm:$0xff]
      %v361 = vld [vmem:[#allocation2 + $0x20] sm:$0xff]
      %v362 = vld [vmem:[#allocation2 + $0x28] sm:$0xff]
      %v363 = vld [vmem:[#allocation2 + $0x30] sm:$0xff]
      %v364 = vld [vmem:[#allocation2 + $0x38] sm:$0xff]
      %v365 = vld [vmem:[#allocation2 + $0x40] sm:$0xff]
      %v366 = vld [vmem:[#allocation2 + $0x48] sm:$0xff]
      %v367 = vld [vmem:[#allocation2 + $0x50] sm:$0xff]
      %v368 = vld [vmem:[#allocation2 + $0x58] sm:$0xff]
      %v369 = vld [vmem:[#allocation2 + $0x60] sm:$0xff]
      %v370 = vld [vmem:[#allocation2 + $0x68] sm:$0xff]
      %v371 = vld [vmem:[#allocation2 + $0x70] sm:$0xff]
      %v372 = vld [vmem:[#allocation2 + $0x78] sm:$0xff]
      %v373 = vld [vmem:[%s3] sm:$0xff]
      %v374 = vld [vmem:[%s3 + $0x8] sm:$0xff]
      %v375 = vld [vmem:[%s3 + $0x10] sm:$0xff]
      %v376 = vld [vmem:[%s3 + $0x18] sm:$0xff]
      %v377 = vld [vmem:[%s3 + $0x20] sm:$0xff]
      %v378 = vld [vmem:[%s3 + $0x28] sm:$0xff]
      %v379 = vld [vmem:[%s3 + $0x30] sm:$0xff]
      %v380 = vld [vmem:[%s3 + $0x38] sm:$0xff]
      %v381 = vld [vmem:[%s3 + $0x40] sm:$0xff]
      %v382 = vld [vmem:[%s3 + $0x48] sm:$0xff]
      %v383 = vld [vmem:[%s3 + $0x50] sm:$0xff]
      %v384 = vld [vmem:[%s3 + $0x58] sm:$0xff]
      %v385 = vld [vmem:[%s3 + $0x60] sm:$0xff]
      %v386 = vld [vmem:[%s3 + $0x68] sm:$0xff]
      %v387 = vld [vmem:[%s3 + $0x70] sm:$0xff]
      %v388 = vld [vmem:[%s3 + $0x78] sm:$0xff]
      %390 = vset.pattern.permute.xlu0 0
      %391 = vperm.xlu0 %390, %v373
      %v392 = vpop.permute.xlu0 %391
      %395 = vset.pattern.permute.xlu0 0
      %396 = vperm.xlu0 %395, %v374
      %v397 = vpop.permute.xlu0 %396
      %400 = vset.pattern.permute.xlu0 0
      %401 = vperm.xlu0 %400, %v375
      %v402 = vpop.permute.xlu0 %401
      %405 = vset.pattern.permute.xlu0 0
      %406 = vperm.xlu0 %405, %v376
      %v407 = vpop.permute.xlu0 %406
      %410 = vset.pattern.permute.xlu0 0
      %411 = vperm.xlu0 %410, %v377
      %v412 = vpop.permute.xlu0 %411
      %415 = vset.pattern.permute.xlu0 0
      %416 = vperm.xlu0 %415, %v378
      %v417 = vpop.permute.xlu0 %416
      %420 = vset.pattern.permute.xlu0 0
      %421 = vperm.xlu0 %420, %v379
      %v422 = vpop.permute.xlu0 %421
      %425 = vset.pattern.permute.xlu0 0
      %426 = vperm.xlu0 %425, %v380
      %v427 = vpop.permute.xlu0 %426
      %430 = vset.pattern.permute.xlu0 0
      %431 = vperm.xlu0 %430, %v381
      %v432 = vpop.permute.xlu0 %431
      %435 = vset.pattern.permute.xlu0 0
      %436 = vperm.xlu0 %435, %v382
      %v437 = vpop.permute.xlu0 %436
      %440 = vset.pattern.permute.xlu0 0
      %441 = vperm.xlu0 %440, %v383
      %v442 = vpop.permute.xlu0 %441
      %445 = vset.pattern.permute.xlu0 0
      %446 = vperm.xlu0 %445, %v384
      %v447 = vpop.permute.xlu0 %446
      %450 = vset.pattern.permute.xlu0 0
      %451 = vperm.xlu0 %450, %v385
      %v452 = vpop.permute.xlu0 %451
      %455 = vset.pattern.permute.xlu0 0
      %456 = vperm.xlu0 %455, %v386
      %v457 = vpop.permute.xlu0 %456
      %460 = vset.pattern.permute.xlu0 0
      %461 = vperm.xlu0 %460, %v387
      %v462 = vpop.permute.xlu0 %461
      %465 = vset.pattern.permute.xlu0 0
      %466 = vperm.xlu0 %465, %v388
      %v467 = vpop.permute.xlu0 %466
      %v469 = vmul.f32 %v357, %v392
      %v470 = vmul.f32 %v358, %v397
      %v471 = vmul.f32 %v359, %v402
      %v472 = vmul.f32 %v360, %v407
      %v473 = vmul.f32 %v361, %v412
      %v474 = vmul.f32 %v362, %v417
      %v475 = vmul.f32 %v363, %v422
      %v476 = vmul.f32 %v364, %v427
      %v477 = vmul.f32 %v365, %v432
      %v478 = vmul.f32 %v366, %v437
      %v479 = vmul.f32 %v367, %v442
      %v480 = vmul.f32 %v368, %v447
      %v481 = vmul.f32 %v369, %v452
      %v482 = vmul.f32 %v370, %v457
      %v483 = vmul.f32 %v371, %v462
      %v484 = vmul.f32 %v372, %v467
      %v485 = vpack.c.bf16 %v469, %v469
      %v486 = vpack.c.bf16 %v470, %v470
      %v487 = vpack.c.bf16 %v471, %v471
      %v488 = vpack.c.bf16 %v472, %v472
      %v489 = vpack.c.bf16 %v473, %v473
      %v490 = vpack.c.bf16 %v474, %v474
      %v491 = vpack.c.bf16 %v475, %v475
      %v492 = vpack.c.bf16 %v476, %v476
      %v493 = vpack.c.bf16 %v477, %v477
      %v494 = vpack.c.bf16 %v478, %v478
      %v495 = vpack.c.bf16 %v479, %v479
      %v496 = vpack.c.bf16 %v480, %v480
      %v497 = vpack.c.bf16 %v481, %v481
      %v498 = vpack.c.bf16 %v482, %v482
      %v499 = vpack.c.bf16 %v483, %v483
      %v500 = vpack.c.bf16 %v484, %v484
      %501 = vst [vmem:[#allocation3] sm:$0xf] %v485
      %502 = vst [vmem:[#allocation3 + $0x4] sm:$0xf] %v486
      %503 = vst [vmem:[#allocation3 + $0x8] sm:$0xf] %v487
      %504 = vst [vmem:[#allocation3 + $0xc] sm:$0xf] %v488
      %505 = vst [vmem:[#allocation3 + $0x10] sm:$0xf] %v489
      %506 = vst [vmem:[#allocation3 + $0x14] sm:$0xf] %v490
      %507 = vst [vmem:[#allocation3 + $0x18] sm:$0xf] %v491
      %508 = vst [vmem:[#allocation3 + $0x1c] sm:$0xf] %v492
      %509 = vst [vmem:[#allocation3 + $0x20] sm:$0xf] %v493
      %510 = vst [vmem:[#allocation3 + $0x24] sm:$0xf] %v494
      %511 = vst [vmem:[#allocation3 + $0x28] sm:$0xf] %v495
      %512 = vst [vmem:[#allocation3 + $0x2c] sm:$0xf] %v496
      %513 = vst [vmem:[#allocation3 + $0x30] sm:$0xf] %v497
      %514 = vst [vmem:[#allocation3 + $0x34] sm:$0xf] %v498
      %515 = vst [vmem:[#allocation3 + $0x38] sm:$0xf] %v499
      %516 = vst [vmem:[#allocation3 + $0x3c] sm:$0xf] %v500
    $region25: #{tpu_custom_call.1} parent=1 // pred_fallthru
      _
    // Predicated region
    $region26: #{tpu_custom_call.1} parent=1 // pred_check
      _
    $region27: #{tpu_custom_call.1} parent=1 // pred_check_branch
      %518 = sbr.rel (0) target = $region29
    $region28: #{tpu_custom_call.1} parent=1 // pred_region
      %520 = vsyncadd [#allocation4], 0
      %s521 = sshll.u32 [#allocation3], 4
      %s522 = int_to_ptr.vmem [resolvable:$true] %s521
      %s523 = sshll.u32 %s4, 4
      %s524 = int_to_ptr.hbm [resolvable:$true] %s523
      %529 = dma.vmem_to_hbm [thread:$0]  %s522, 1024, %s524, [#allocation4], 64, 64, 4
    $region29: #{tpu_custom_call.1} parent=1 // pred_fallthru
      _
    // Predicated region
    $region30: #{tpu_custom_call.1} parent=1 // pred_check
      _
    $region31: #{tpu_custom_call.1} parent=1 // pred_check_branch
      %531 = sbr.rel (0) target = $region33
    $region32: #{tpu_custom_call.1} parent=1 // pred_region
      %533 = dma.done [#allocation4], 1024
    $region33: #{tpu_custom_call.1} parent=1 // pred_fallthru
      _
    %534 = vsyncpa [#allocation4], 1

</llo_original>
